<compile_context>
chip_gen: v6e
topology: v6e:2x2x1
jax: 0.10.0
libtpu: 0.0.40
codegen_flags: <defaults>
</compile_context>

<pallas_src>
import functools

import jax
import jax.numpy as jnp
import numpy as np
from jax.experimental import pallas as pl
from jax.experimental.pallas import tpu as pltpu


def _round_up(x, m):
    return (x + m - 1) // m * m


# ----------------------------- Pallas kernel --------------------------------
def spt_kernel(x_ref, gamma_ref, beta_ref, w_ref, bias_ref, o_ref, *, true_k):
    # x_ref:      (TM, Kp)  bf16 tile of flattened patches (K zero-padded)
    # gamma/beta: (1, Kp)   f32 LayerNorm affine params (zero-padded)
    # w_ref:      (Kp, Np)  bf16 Linear weight, x @ W layout (zero-padded)
    # bias_ref:   (1, Np)   f32 Linear bias (zero-padded)
    # o_ref:      (TM, Np)  output tile
    x = x_ref[...].astype(jnp.float32)

    # One-pass LayerNorm moments over the TRUE patch_dim (padded columns are
    # zero so they do not perturb the sums); biased variance, eps=1e-5 (torch).
    inv_k = 1.0 / true_k
    s1 = jnp.sum(x, axis=-1, keepdims=True)
    s2 = jnp.sum(x * x, axis=-1, keepdims=True)
    mean = s1 * inv_k
    var = s2 * inv_k - mean * mean
    y = (x - mean) * jax.lax.rsqrt(var + 1e-5)
    # gamma/beta are zero in padded columns -> y is exactly 0 there.
    y = y * gamma_ref[...] + beta_ref[...]

    # MXU matmul: bf16 operands, f32 accumulation.
    out = jnp.dot(y.astype(jnp.bfloat16), w_ref[...],
                  preferred_element_type=jnp.float32)
    out = out + bias_ref[...]
    o_ref[...] = out.astype(o_ref.dtype)


def spt_layernorm_linear(patches, gamma, beta, w, bias, *, tile_m=512,
                         out_dtype=jnp.float32):
    """patches: (M, patch_dim) -> (M, dim) via LayerNorm + Linear in Pallas."""
    M, patch_dim = patches.shape
    dim = w.shape[1]

    # Lane-dense output: pad the output feature dim up to a multiple of 128 so
    # output stores are full-width (no masked vst on a narrow `dim`).
    dim_pad = _round_up(dim, 128)
    if dim_pad != dim:
        w = jnp.pad(w, ((0, 0), (0, dim_pad - dim)))
        bias = jnp.pad(bias, ((0, 0), (0, dim_pad - dim)))

    # Conditional K lane-padding (exact with sum-based stats / true_k divide,
    # zero-padded gamma/beta and zero W rows).  Aligned configs pay nothing.
    k_pad = _round_up(patch_dim, 128)
    if k_pad != patch_dim:
        patches = jnp.pad(patches, ((0, 0), (0, k_pad - patch_dim)))
        gamma = jnp.pad(gamma, ((0, 0), (0, k_pad - patch_dim)))
        beta = jnp.pad(beta, ((0, 0), (0, k_pad - patch_dim)))
        w = jnp.pad(w, ((0, k_pad - patch_dim), (0, 0)))

    # bf16 x stream + bf16 resident weight (halves HBM and VMEM bytes).
    patches = patches.astype(jnp.bfloat16)
    w = w.astype(jnp.bfloat16)

    # Big row tile keeps the MXU fed and amortises per-grid-step overhead.
    # Multiple of 16 (bf16 sublane packing); M is zero-padded to the tile.
    # Padded rows LayerNorm to finite values (var=0 -> rsqrt(eps)) and are
    # sliced off below.
    tile_m = _round_up(min(tile_m, _round_up(M, 16)), 16)
    m_pad = _round_up(M, tile_m)
    if m_pad != M:
        patches = jnp.pad(patches, ((0, m_pad - M), (0, 0)))

    grid = (m_pad // tile_m,)

    # VMEM budget: actual footprint + margin, capped below v7x's 64 MiB
    # physical so the compiler keeps internal-scratch headroom.
    out_itemsize = jnp.dtype(out_dtype).itemsize
    footprint = (
        2 * tile_m * k_pad * 2                    # double-buffered bf16 x tiles
        + 2 * tile_m * dim_pad * out_itemsize     # double-buffered out tiles
        + 2 * k_pad * dim_pad * 2                 # resident bf16 W
        + 3 * tile_m * k_pad * 4                  # in-kernel f32 temporaries
        + 8 * (k_pad + dim_pad) * 4               # gamma/beta/bias buffers
    )
    vmem_limit = min(max(int(1.5 * footprint) + (2 << 20), 32 << 20), 48 << 20)

    kernel = functools.partial(spt_kernel, true_k=patch_dim)
    out = pl.pallas_call(
        kernel,
        out_shape=jax.ShapeDtypeStruct((m_pad, dim_pad), out_dtype),
        grid_spec=pltpu.PrefetchScalarGridSpec(
            num_scalar_prefetch=0,
            grid=grid,
            in_specs=[
                # TODO(synk): sweep pipeline_mode=pl.Buffered(3) on this spec
                # when the DMA is still exposed and the VMEM budget allows.
                pl.BlockSpec((tile_m, k_pad), lambda i: (i, 0)),
                pl.BlockSpec((1, k_pad), lambda i: (0, 0)),
                pl.BlockSpec((1, k_pad), lambda i: (0, 0)),
                pl.BlockSpec((k_pad, dim_pad), lambda i: (0, 0)),
                pl.BlockSpec((1, dim_pad), lambda i: (0, 0)),
            ],
            out_specs=pl.BlockSpec((tile_m, dim_pad), lambda i: (i, 0)),
        ),
        compiler_params=pltpu.CompilerParams(
            dimension_semantics=("parallel",),
            vmem_limit_bytes=vmem_limit,
        ),
    )(patches, gamma, beta, w, bias)
    # TODO(synk): when `dim` stays far below 128, returning the padded
    # (m_pad, dim_pad) tensor to the caller would skip this extra slice copy.
    return out[:M, :dim]


# ------------------------------ JAX glue -------------------------------------
def spt_forward(x, params, *, patch_size):
    """x: (B, C, H, W) NCHW.  Returns (B, num_patches, dim) float32."""
    B, C, H, W = x.shape
    p = patch_size
    assert H % p == 0 and W % p == 0
    h, w_ = H // p, W // p

    # bf16 image: halves the HBM traffic of the 5x-expanded intermediate and
    # of the kernel's x stream (LN is still computed in f32 inside the kernel).
    xb = x.astype(jnp.bfloat16)

    # One zero pad; the 4 shifted variants (and the identity) are slices of it.
    xp = jnp.pad(xb, ((0, 0), (0, 0), (1, 1), (1, 1)))
    x_cat = jnp.concatenate([
        xp[:, :, 1:H + 1, 1:W + 1],   # identity
        xp[:, :, 1:H + 1, 0:W],       # F.pad(x, ( 1,-1, 0, 0))
        xp[:, :, 1:H + 1, 2:W + 2],   # F.pad(x, (-1, 1, 0, 0))
        xp[:, :, 0:H,     1:W + 1],   # F.pad(x, ( 0, 0, 1,-1))
        xp[:, :, 2:H + 2, 1:W + 1],   # F.pad(x, ( 0, 0,-1, 1))
    ], axis=1)                        # (B, 5C, H, W), c5 = shift*C + c

    # Kernel-side feature layout (c5, p1, p2) keeps the image minor axis minor
    # through the rearrange (no tiny 5C minor-dim transpose).  W/gamma/beta are
    # row-permuted once to match (LayerNorm stats are permutation-invariant),
    # so the result equals the torch (p1, p2, c5) layout exactly.
    C5 = 5 * C
    patches = x_cat.reshape(B, C5, h, p, w_, p)
    patches = patches.transpose(0, 2, 4, 1, 3, 5)      # b h w c5 p1 p2
    patches = patches.reshape(B * h * w_, C5 * p * p)
    # TODO(synk): for large images, gather patch rows in-kernel from the single
    # padded image via a scalar-prefetched offset table to skip the 5x-expanded
    # HBM intermediate entirely.

    # perm[new_idx] = torch_idx, torch_idx = (p1*p + p2)*C5 + c5.
    c5 = np.arange(C5)[:, None, None]
    p1 = np.arange(p)[None, :, None]
    p2 = np.arange(p)[None, None, :]
    perm = ((p1 * p + p2) * C5 + c5).reshape(-1)

    gamma = params["gamma"][:, perm]
    beta = params["beta"][:, perm]
    w_mat = params["w"][perm, :]

    out = spt_layernorm_linear(patches, gamma, beta, w_mat, params["bias"],
                               out_dtype=jnp.float32)
    return out.reshape(B, h * w_, -1)


def init_spt_params(key, *, dim, patch_size, channels):
    patch_dim = patch_size * patch_size * 5 * channels
    k_w, k_b = jax.random.split(key)
    bound = 1.0 / jnp.sqrt(patch_dim)
    return {
        "gamma": jnp.ones((1, patch_dim), jnp.float32),
        "beta": jnp.zeros((1, patch_dim), jnp.float32),
        # Linear weight stored as (patch_dim, dim) so the kernel does x @ W.
        "w": jax.random.uniform(k_w, (patch_dim, dim), jnp.float32, -bound, bound),
        "bias": jax.random.uniform(k_b, (dim,), jnp.float32, -bound, bound).reshape(1, dim),
    }


# ------------------------------- main ----------------------------------------
if __name__ == "__main__":
    B, C, H, W = 2, 4, 16, 16
    patch_size = 4
    dim = 32

    key = jax.random.PRNGKey(0)
    k_x, k_p = jax.random.split(key)
    x = jax.random.normal(k_x, (B, C, H, W), jnp.float32)
    params = init_spt_params(k_p, dim=dim, patch_size=patch_size, channels=C)

    fwd = jax.jit(functools.partial(spt_forward, patch_size=patch_size))
    out = fwd(x, params)
    out = jax.block_until_ready(out)

    # Pure-JAX f32 reference replicating the torch forward exactly
    # (independent pad path: F.pad with negative crop via lax.pad).
    def _shift_pad(xx, shift):
        l, r, t, b = shift
        return jax.lax.pad(
            xx, jnp.array(0.0, dtype=xx.dtype),
            ((0, 0, 0), (0, 0, 0), (t, b, 0), (l, r, 0)),
        )

    shifts = ((1, -1, 0, 0), (-1, 1, 0, 0), (0, 0, 1, -1), (0, 0, -1, 1))
    x_cat = jnp.concatenate([x, *[_shift_pad(x, s) for s in shifts]], axis=1)
    C5 = 5 * C
    h, w = H // patch_size, W // patch_size
    ref_p = x_cat.reshape(B, C5, h, patch_size, w, patch_size)
    ref_p = ref_p.transpose(0, 2, 4, 3, 5, 1).reshape(B, h * w, -1)
    mu = ref_p.mean(-1, keepdims=True)
    var = ((ref_p - mu) ** 2).mean(-1, keepdims=True)
    ref_n = (ref_p - mu) / jnp.sqrt(var + 1e-5) * params["gamma"] + params["beta"]
    ref_out = ref_n @ params["w"] + params["bias"]

    assert out.shape == (B, h * w, dim)
    assert out.dtype == jnp.float32
    # bf16 x stream + bf16 MXU operands (f32 accumulation) -> ~1e-2 tolerance.
    err = float(jnp.max(jnp.abs(out - ref_out)))
    assert jnp.allclose(out, ref_out, atol=3e-2, rtol=3e-2), err
    print("KERNEL_OK")
</pallas_src>

<mosaic_0001>
module attributes {stable_mosaic.version = 11 : i64} {
  func.func @spt_kernel(%arg0: i32, %arg1: memref<32x384xbf16, #tpu.memory_space<vmem>>, %arg2: memref<1x384xf32, #tpu.memory_space<vmem>>, %arg3: memref<1x384xf32, #tpu.memory_space<vmem>>, %arg4: memref<384x128xbf16, #tpu.memory_space<vmem>>, %arg5: memref<1x128xf32, #tpu.memory_space<vmem>>, %arg6: memref<32x128xf32, #tpu.memory_space<vmem>>) attributes {dimension_semantics = [#tpu.dimension_semantics<parallel>], iteration_bounds = array<i64: 1>, scalar_prefetch = 0 : i64, scratch_operands = 0 : i64, tpu.core_type = #tpu.core_type<tc>, window_params = [{transform_indices = @transform_0, window_bounds = array<i64: 32, 384>}, {pipeline_mode = #tpu.pipeline_mode<synchronous>, transform_indices = @transform_1, window_bounds = array<i64: 1, 384>}, {pipeline_mode = #tpu.pipeline_mode<synchronous>, transform_indices = @transform_2, window_bounds = array<i64: 1, 384>}, {pipeline_mode = #tpu.pipeline_mode<synchronous>, transform_indices = @transform_3, window_bounds = array<i64: 384, 128>}, {pipeline_mode = #tpu.pipeline_mode<synchronous>, transform_indices = @transform_4, window_bounds = array<i64: 1, 128>}, {transform_indices = @transform_5, window_bounds = array<i64: 32, 128>}]} {
    %c0 = arith.constant 0 : index
    %c0_0 = arith.constant 0 : index
    %0 = vector.load %arg1[%c0, %c0_0] : memref<32x384xbf16, #tpu.memory_space<vmem>>, vector<32x384xbf16>
    %1 = arith.extf %0 : vector<32x384xbf16> to vector<32x384xf32>
    %cst = arith.constant dense<0.000000e+00> : vector<32xf32>
    %2 = vector.multi_reduction <add>, %1, %cst [1] : vector<32x384xf32> to vector<32xf32>
    %3 = vector.shape_cast %2 : vector<32xf32> to vector<32x1xf32>
    %4 = arith.mulf %1, %1 : vector<32x384xf32>
    %cst_1 = arith.constant dense<0.000000e+00> : vector<32xf32>
    %5 = vector.multi_reduction <add>, %4, %cst_1 [1] : vector<32x384xf32> to vector<32xf32>
    %6 = vector.shape_cast %5 : vector<32xf32> to vector<32x1xf32>
    %cst_2 = arith.constant 3.125000e-03 : f32
    %7 = vector.broadcast %cst_2 : f32 to vector<32x1xf32>
    %8 = arith.mulf %3, %7 : vector<32x1xf32>
    %cst_3 = arith.constant 3.125000e-03 : f32
    %9 = vector.broadcast %cst_3 : f32 to vector<32x1xf32>
    %10 = arith.mulf %6, %9 : vector<32x1xf32>
    %11 = arith.mulf %8, %8 : vector<32x1xf32>
    %12 = arith.subf %10, %11 : vector<32x1xf32>
    %13 = vector.broadcast %8 : vector<32x1xf32> to vector<32x384xf32>
    %14 = arith.subf %1, %13 : vector<32x384xf32>
    %cst_4 = arith.constant 9.99999974E-6 : f32
    %15 = vector.broadcast %cst_4 : f32 to vector<32x1xf32>
    %16 = arith.addf %12, %15 : vector<32x1xf32>
    %17 = math.rsqrt %16 : vector<32x1xf32>
    %18 = vector.broadcast %17 : vector<32x1xf32> to vector<32x384xf32>
    %19 = arith.mulf %14, %18 : vector<32x384xf32>
    %c0_5 = arith.constant 0 : index
    %c0_6 = arith.constant 0 : index
    %20 = vector.load %arg2[%c0_5, %c0_6] : memref<1x384xf32, #tpu.memory_space<vmem>>, vector<1x384xf32>
    %21 = vector.broadcast %20 : vector<1x384xf32> to vector<32x384xf32>
    %22 = arith.mulf %19, %21 : vector<32x384xf32>
    %c0_7 = arith.constant 0 : index
    %c0_8 = arith.constant 0 : index
    %23 = vector.load %arg3[%c0_7, %c0_8] : memref<1x384xf32, #tpu.memory_space<vmem>>, vector<1x384xf32>
    %24 = vector.broadcast %23 : vector<1x384xf32> to vector<32x384xf32>
    %25 = arith.addf %22, %24 : vector<32x384xf32>
    %26 = arith.truncf %25 : vector<32x384xf32> to vector<32x384xbf16>
    %c0_9 = arith.constant 0 : index
    %c0_10 = arith.constant 0 : index
    %27 = vector.load %arg4[%c0_9, %c0_10] : memref<384x128xbf16, #tpu.memory_space<vmem>>, vector<384x128xbf16>
    %cst_11 = arith.constant dense<0.000000e+00> : vector<32x128xf32>
    %28 = tpu.matmul %26, %27, %cst_11 {dimension_numbers = #tpu.dot_dimension_numbers<[1], [0], [0], [1], [0, 0, 1, 1], [], []>} : vector<32x384xbf16>, vector<384x128xbf16>, vector<32x128xf32> -> vector<32x128xf32>
    %c0_12 = arith.constant 0 : index
    %c0_13 = arith.constant 0 : index
    %29 = vector.load %arg5[%c0_12, %c0_13] : memref<1x128xf32, #tpu.memory_space<vmem>>, vector<1x128xf32>
    %30 = vector.broadcast %29 : vector<1x128xf32> to vector<32x128xf32>
    %31 = arith.addf %28, %30 : vector<32x128xf32>
    %c0_14 = arith.constant 0 : index
    %c0_15 = arith.constant 0 : index
    %32 = vector.load %arg6[%c0_14, %c0_15] : memref<32x128xf32, #tpu.memory_space<vmem>>, vector<32x128xf32>
    tpu.vector_store %arg6[%c0_14, %c0_15], %31 {strides = array<i32>} : memref<32x128xf32, #tpu.memory_space<vmem>>, vector<32x128xf32>,
    return
  }
  func.func @transform_0(%arg0: i32) -> (i32, i32) {
    %c0_i32 = arith.constant 0 : i32
    %c0_i32_0 = arith.constant 0 : i32
    return %arg0, %c0_i32 : i32, i32
  }
  func.func @transform_1(%arg0: i32) -> (i32, i32) {
    %c0_i32 = arith.constant 0 : i32
    %c0_i32_0 = arith.constant 0 : i32
    %c0_i32_1 = arith.constant 0 : i32
    return %c0_i32, %c0_i32_0 : i32, i32
  }
  func.func @transform_2(%arg0: i32) -> (i32, i32) {
    %c0_i32 = arith.constant 0 : i32
    %c0_i32_0 = arith.constant 0 : i32
    %c0_i32_1 = arith.constant 0 : i32
    return %c0_i32, %c0_i32_0 : i32, i32
  }
  func.func @transform_3(%arg0: i32) -> (i32, i32) {
    %c0_i32 = arith.constant 0 : i32
    %c0_i32_0 = arith.constant 0 : i32
    %c0_i32_1 = arith.constant 0 : i32
    return %c0_i32, %c0_i32_0 : i32, i32
  }
  func.func @transform_4(%arg0: i32) -> (i32, i32) {
    %c0_i32 = arith.constant 0 : i32
    %c0_i32_0 = arith.constant 0 : i32
    %c0_i32_1 = arith.constant 0 : i32
    return %c0_i32, %c0_i32_0 : i32, i32
  }
  func.func @transform_5(%arg0: i32) -> (i32, i32) {
    %c0_i32 = arith.constant 0 : i32
    %c0_i32_0 = arith.constant 0 : i32
    return %arg0, %c0_i32 : i32, i32
  }
}

</mosaic_0001>

<llo_original>
// kernel: spt_forward.1
$region0: #{spt_forward.1}
  #allocation0 [shape = 'u32[]', space=smem, size = 0x4, offset = 0x4, fixed_abs, tag = 'smem constant byte address 0x4 - core index']
  #allocation1 [shape = 'u32[144,128]{1,0:T(1,128)}', space=vmem, size = 0x12000, scoped, tag = 'internal scratch']
  %s0 = inlined_call_operand.vmem [shape: bf16[32,384], index: 0, kind: input, shape index: {}]
  %s1 = inlined_call_operand.vmem [shape: f32[1,384], index: 1, kind: input, shape index: {}]
  %s2 = inlined_call_operand.vmem [shape: f32[1,384], index: 2, kind: input, shape index: {}]
  %s3 = inlined_call_operand.vmem [shape: bf16[384,128], index: 3, kind: input, shape index: {}]
  %s4 = inlined_call_operand.vmem [shape: f32[1,128], index: 4, kind: input, shape index: {}]
  %s5 = inlined_call_operand.hbm [shape: f32[32,128], index: 5, kind: output, shape index: {}]
  %s6 = sld [smem:[#allocation0]]
  $region30: #{spt_forward.1} parent=0
    _
  %s8 = ssub.s32 1, %s6
  %s9 = scalar_select 0, %s8, %s6
  $region1: #{spt_forward.1} parent=0
    #allocation2 [shape = 'u8[16384]{0}', space=vmem, size = 0x4000, scoped, tag = 'output window, operand 0, single buffered']
    #allocation3 [shape = 's32[1]{0}', space=sflag, size = 0x4, scoped, tag = 'scoped memory for spt_forward.1']
    %10 = vsyncpa [#allocation3], 0
    // Predicated region
    $region2: #{spt_forward.1} parent=1 // pred_check
      _
    $region3: #{spt_forward.1} parent=1 // pred_check_branch
      %12 = sbr.rel (0) target = $region5
    $region4: #{spt_forward.1} parent=1 // pred_region
      _
    $region5: #{spt_forward.1} parent=1 // pred_fallthru
      _
    // Predicated region
    $region6: #{spt_forward.1} parent=1 // pred_check
      _
    $region7: #{spt_forward.1} parent=1 // pred_check_branch
      %14 = sbr.rel (0) target = $region9
    $region8: #{spt_forward.1} parent=1 // pred_region
      _
    $region9: #{spt_forward.1} parent=1 // pred_fallthru
      _
    // Predicated region
    $region10: #{spt_forward.1} parent=1 // pred_check
      _
    $region11: #{spt_forward.1} parent=1 // pred_check_branch
      %16 = sbr.rel (0) target = $region13
    $region12: #{spt_forward.1} parent=1 // pred_region
      _
    $region13: #{spt_forward.1} parent=1 // pred_fallthru
      _
    // Predicated region
    $region14: #{spt_forward.1} parent=1 // pred_check
      _
    $region15: #{spt_forward.1} parent=1 // pred_check_branch
      %18 = sbr.rel (0) target = $region17
    $region16: #{spt_forward.1} parent=1 // pred_region
      _
    $region17: #{spt_forward.1} parent=1 // pred_fallthru
      _
    // Predicated region
    $region18: #{spt_forward.1} parent=1 // pred_check
      _
    $region19: #{spt_forward.1} parent=1 // pred_check_branch
      %20 = sbr.rel (0) target = $region21
    $region20: #{spt_forward.1} parent=1 // pred_region
      _
    $region21: #{spt_forward.1} parent=1 // pred_fallthru
      _
    %v22 = vld [vmem:[%s0] sm:$0xff]
    %v23 = vld [vmem:[%s0 + $0x8] sm:$0xf]
    %v24 = vld [vmem:[%s0 + $0xc] sm:$0xff]
    %v25 = vld [vmem:[%s0 + $0x14] sm:$0xf]
    %v26 = vld [vmem:[%s0 + $0x18] sm:$0xff]
    %v27 = vld [vmem:[%s0 + $0x20] sm:$0xf]
    %v28 = vld [vmem:[%s0 + $0x24] sm:$0xff]
    %v29 = vld [vmem:[%s0 + $0x2c] sm:$0xf]
    %v30 = vunpack.c.l.bf16 %v22
    %v31 = vunpack.c.h.bf16 %v22
    %v32 = vunpack.c.l.bf16 %v23
    %v33 = vunpack.c.l.bf16 %v24
    %v34 = vunpack.c.h.bf16 %v24
    %v35 = vunpack.c.l.bf16 %v25
    %v36 = vunpack.c.l.bf16 %v26
    %v37 = vunpack.c.h.bf16 %v26
    %v38 = vunpack.c.l.bf16 %v27
    %v39 = vunpack.c.l.bf16 %v28
    %v40 = vunpack.c.h.bf16 %v28
    %v41 = vunpack.c.l.bf16 %v29
    %v42 = vadd.f32 %v30, %v31
    %v43 = vadd.f32 %v42, %v32
    %44 = vadd.xlane.f32.xlu0 %v43
    %v45 = vpop.xlane.xlu0 %44
    %v46 = vadd.f32 %v33, %v34
    %v47 = vadd.f32 %v46, %v35
    %48 = vadd.xlane.f32.xlu0 %v47
    %v49 = vpop.xlane.xlu0 %48
    %v50 = vadd.f32 %v36, %v37
    %v51 = vadd.f32 %v50, %v38
    %52 = vadd.xlane.f32.xlu0 %v51
    %v53 = vpop.xlane.xlu0 %52
    %v54 = vadd.f32 %v39, %v40
    %v55 = vadd.f32 %v54, %v41
    %56 = vadd.xlane.f32.xlu0 %v55
    %v57 = vpop.xlane.xlu0 %56
    %v58 = vmul.f32 %v30, %v30
    %v59 = vmul.f32 %v31, %v31
    %v60 = vmul.f32 %v32, %v32
    %v61 = vmul.f32 %v33, %v33
    %v62 = vmul.f32 %v34, %v34
    %v63 = vmul.f32 %v35, %v35
    %v64 = vmul.f32 %v36, %v36
    %v65 = vmul.f32 %v37, %v37
    %v66 = vmul.f32 %v38, %v38
    %v67 = vmul.f32 %v39, %v39
    %v68 = vmul.f32 %v40, %v40
    %v69 = vmul.f32 %v41, %v41
    %v70 = vadd.f32 %v58, %v59
    %v71 = vadd.f32 %v70, %v60
    %72 = vadd.xlane.f32.xlu0 %v71
    %v73 = vpop.xlane.xlu0 %72
    %v74 = vadd.f32 %v61, %v62
    %v75 = vadd.f32 %v74, %v63
    %76 = vadd.xlane.f32.xlu0 %v75
    %v77 = vpop.xlane.xlu0 %76
    %v78 = vadd.f32 %v64, %v65
    %v79 = vadd.f32 %v78, %v66
    %80 = vadd.xlane.f32.xlu0 %v79
    %v81 = vpop.xlane.xlu0 %80
    %v82 = vadd.f32 %v67, %v68
    %v83 = vadd.f32 %v82, %v69
    %84 = vadd.xlane.f32.xlu0 %v83
    %v85 = vpop.xlane.xlu0 %84
    %v86 = vmul.f32 %v45, 0.003125
    %v87 = vmul.f32 %v49, 0.003125
    %v88 = vmul.f32 %v53, 0.003125
    %v89 = vmul.f32 %v57, 0.003125
    %v90 = vmul.f32 %v73, 0.003125
    %v91 = vmul.f32 %v77, 0.003125
    %v92 = vmul.f32 %v81, 0.003125
    %v93 = vmul.f32 %v85, 0.003125
    %v94 = vmul.f32 %v86, %v86
    %v95 = vmul.f32 %v87, %v87
    %v96 = vmul.f32 %v88, %v88
    %v97 = vmul.f32 %v89, %v89
    %v98 = vsub.f32 %v90, %v94
    %v99 = vsub.f32 %v91, %v95
    %v100 = vsub.f32 %v92, %v96
    %v101 = vsub.f32 %v93, %v97
    %v102 = vsub.f32 %v30, %v86
    %v103 = vsub.f32 %v31, %v86
    %v104 = vsub.f32 %v32, %v86
    %v105 = vsub.f32 %v33, %v87
    %v106 = vsub.f32 %v34, %v87
    %v107 = vsub.f32 %v35, %v87
    %v108 = vsub.f32 %v36, %v88
    %v109 = vsub.f32 %v37, %v88
    %v110 = vsub.f32 %v38, %v88
    %v111 = vsub.f32 %v39, %v89
    %v112 = vsub.f32 %v40, %v89
    %v113 = vsub.f32 %v41, %v89
    %v114 = vadd.f32 %v98, 1e-05
    %v115 = vadd.f32 %v99, 1e-05
    %v116 = vadd.f32 %v100, 1e-05
    %v117 = vadd.f32 %v101, 1e-05
    %v118 = vrsqrt.pop %v114
    %v119 = vrsqrt.pop %v115
    %v120 = vrsqrt.pop %v116
    %v121 = vrsqrt.pop %v117
    %v122 = vmul.f32 %v102, %v118
    %v123 = vmul.f32 %v103, %v118
    %v124 = vmul.f32 %v104, %v118
    %v125 = vmul.f32 %v105, %v119
    %v126 = vmul.f32 %v106, %v119
    %v127 = vmul.f32 %v107, %v119
    %v128 = vmul.f32 %v108, %v120
    %v129 = vmul.f32 %v109, %v120
    %v130 = vmul.f32 %v110, %v120
    %v131 = vmul.f32 %v111, %v121
    %v132 = vmul.f32 %v112, %v121
    %v133 = vmul.f32 %v113, %v121
    %v134 = vld [vmem:[%s1] sm:$0x7]
    %v136 = vlaneseq
    %v137 = vshrl.u32 %v136, 7
    %v138 = vsub.s32 0, %v137
    %v139 = vrot.slane %v134, %v138
    %v140 = vlaneseq
    %v141 = vshrl.u32 %v140, 7
    %v142 = vsub.s32 1, %v141
    %v143 = vrot.slane %v134, %v142
    %v144 = vlaneseq
    %v145 = vshrl.u32 %v144, 7
    %v146 = vsub.s32 2, %v145
    %v147 = vrot.slane %v134, %v146
    %v151 = vmul.f32 %v122, %v139
    %v152 = vmul.f32 %v123, %v143
    %v153 = vmul.f32 %v124, %v147
    %v154 = vmul.f32 %v125, %v139
    %v155 = vmul.f32 %v126, %v143
    %v156 = vmul.f32 %v127, %v147
    %v157 = vmul.f32 %v128, %v139
    %v158 = vmul.f32 %v129, %v143
    %v159 = vmul.f32 %v130, %v147
    %v160 = vmul.f32 %v131, %v139
    %v161 = vmul.f32 %v132, %v143
    %v162 = vmul.f32 %v133, %v147
    %v163 = vld [vmem:[%s2] sm:$0x7]
    %v165 = vlaneseq
    %v166 = vshrl.u32 %v165, 7
    %v167 = vsub.s32 0, %v166
    %v168 = vrot.slane %v163, %v167
    %v169 = vlaneseq
    %v170 = vshrl.u32 %v169, 7
    %v171 = vsub.s32 1, %v170
    %v172 = vrot.slane %v163, %v171
    %v173 = vlaneseq
    %v174 = vshrl.u32 %v173, 7
    %v175 = vsub.s32 2, %v174
    %v176 = vrot.slane %v163, %v175
    %v180 = vadd.f32 %v151, %v168
    %v181 = vadd.f32 %v152, %v172
    %v182 = vadd.f32 %v153, %v176
    %v183 = vadd.f32 %v154, %v168
    %v184 = vadd.f32 %v155, %v172
    %v185 = vadd.f32 %v156, %v176
    %v186 = vadd.f32 %v157, %v168
    %v187 = vadd.f32 %v158, %v172
    %v188 = vadd.f32 %v159, %v176
    %v189 = vadd.f32 %v160, %v168
    %v190 = vadd.f32 %v161, %v172
    %v191 = vadd.f32 %v162, %v176
    %v192 = vpack.c.bf16 %v183, %v180
    %v193 = vpack.c.bf16 %v184, %v181
    %v194 = vpack.c.bf16 %v185, %v182
    %v195 = vpack.c.bf16 %v189, %v186
    %v196 = vpack.c.bf16 %v190, %v187
    %v197 = vpack.c.bf16 %v191, %v188
    %v198 = vld [vmem:[%s3] sm:$0xf]
    %v199 = vld [vmem:[%s3 + $0x4] sm:$0xf]
    %v200 = vld [vmem:[%s3 + $0x8] sm:$0xf]
    %v201 = vld [vmem:[%s3 + $0xc] sm:$0xf]
    %v202 = vld [vmem:[%s3 + $0x10] sm:$0xf]
    %v203 = vld [vmem:[%s3 + $0x14] sm:$0xf]
    %v204 = vld [vmem:[%s3 + $0x18] sm:$0xf]
    %v205 = vld [vmem:[%s3 + $0x1c] sm:$0xf]
    %v206 = vld [vmem:[%s3 + $0x20] sm:$0xf]
    %v207 = vld [vmem:[%s3 + $0x24] sm:$0xf]
    %v208 = vld [vmem:[%s3 + $0x28] sm:$0xf]
    %v209 = vld [vmem:[%s3 + $0x2c] sm:$0xf]
    %v210 = vld [vmem:[%s3 + $0x30] sm:$0xf]
    %v211 = vld [vmem:[%s3 + $0x34] sm:$0xf]
    %v212 = vld [vmem:[%s3 + $0x38] sm:$0xf]
    %v213 = vld [vmem:[%s3 + $0x3c] sm:$0xf]
    %v214 = vld [vmem:[%s3 + $0x40] sm:$0xf]
    %v215 = vld [vmem:[%s3 + $0x44] sm:$0xf]
    %v216 = vld [vmem:[%s3 + $0x48] sm:$0xf]
    %v217 = vld [vmem:[%s3 + $0x4c] sm:$0xf]
    %v218 = vld [vmem:[%s3 + $0x50] sm:$0xf]
    %v219 = vld [vmem:[%s3 + $0x54] sm:$0xf]
    %v220 = vld [vmem:[%s3 + $0x58] sm:$0xf]
    %v221 = vld [vmem:[%s3 + $0x5c] sm:$0xf]
    %v222 = vld [vmem:[%s3 + $0x60] sm:$0xf]
    %v223 = vld [vmem:[%s3 + $0x64] sm:$0xf]
    %v224 = vld [vmem:[%s3 + $0x68] sm:$0xf]
    %v225 = vld [vmem:[%s3 + $0x6c] sm:$0xf]
    %v226 = vld [vmem:[%s3 + $0x70] sm:$0xf]
    %v227 = vld [vmem:[%s3 + $0x74] sm:$0xf]
    %v228 = vld [vmem:[%s3 + $0x78] sm:$0xf]
    %v229 = vld [vmem:[%s3 + $0x7c] sm:$0xf]
    %v230 = vld [vmem:[%s3 + $0x80] sm:$0xf]
    %v231 = vld [vmem:[%s3 + $0x84] sm:$0xf]
    %v232 = vld [vmem:[%s3 + $0x88] sm:$0xf]
    %v233 = vld [vmem:[%s3 + $0x8c] sm:$0xf]
    %v234 = vld [vmem:[%s3 + $0x90] sm:$0xf]
    %v235 = vld [vmem:[%s3 + $0x94] sm:$0xf]
    %v236 = vld [vmem:[%s3 + $0x98] sm:$0xf]
    %v237 = vld [vmem:[%s3 + $0x9c] sm:$0xf]
    %v238 = vld [vmem:[%s3 + $0xa0] sm:$0xf]
    %v239 = vld [vmem:[%s3 + $0xa4] sm:$0xf]
    %v240 = vld [vmem:[%s3 + $0xa8] sm:$0xf]
    %v241 = vld [vmem:[%s3 + $0xac] sm:$0xf]
    %v242 = vld [vmem:[%s3 + $0xb0] sm:$0xf]
    %v243 = vld [vmem:[%s3 + $0xb4] sm:$0xf]
    %v244 = vld [vmem:[%s3 + $0xb8] sm:$0xf]
    %v245 = vld [vmem:[%s3 + $0xbc] sm:$0xf]
    %v246 = vld [vmem:[%s4] sm:$0x1]
    %v248 = vlaneseq
    %v249 = vshrl.u32 %v248, 7
    %v250 = vsub.s32 0, %v249
    %v251 = vrot.slane %v246, %v250
    %v301 = vunpack.c.l.b16 %v198
    %v302 = vunpack.c.l.b16 %v199
    %v303 = vunpack.c.l.b16 %v200
    %v304 = vunpack.c.l.b16 %v201
    %v305 = vunpack.c.l.b16 %v202
    %v306 = vunpack.c.l.b16 %v203
    %v307 = vunpack.c.l.b16 %v204
    %v308 = vunpack.c.l.b16 %v205
    %v309 = vunpack.c.l.b16 %v206
    %v310 = vunpack.c.l.b16 %v207
    %v311 = vunpack.c.l.b16 %v208
    %v312 = vunpack.c.l.b16 %v209
    %v313 = vunpack.c.l.b16 %v210
    %v314 = vunpack.c.l.b16 %v211
    %v315 = vunpack.c.l.b16 %v212
    %v316 = vunpack.c.l.b16 %v213
    %v317 = vunpack.c.l.b16 %v214
    %v318 = vunpack.c.l.b16 %v215
    %v319 = vunpack.c.l.b16 %v216
    %v320 = vunpack.c.l.b16 %v217
    %v321 = vunpack.c.l.b16 %v218
    %v322 = vunpack.c.l.b16 %v219
    %v323 = vunpack.c.l.b16 %v220
    %v324 = vunpack.c.l.b16 %v221
    %v325 = vunpack.c.l.b16 %v222
    %v326 = vunpack.c.l.b16 %v223
    %v327 = vunpack.c.l.b16 %v224
    %v328 = vunpack.c.l.b16 %v225
    %v329 = vunpack.c.l.b16 %v226
    %v330 = vunpack.c.l.b16 %v227
    %v331 = vunpack.c.l.b16 %v228
    %v332 = vunpack.c.l.b16 %v229
    %v333 = vunpack.c.l.b16 %v230
    %v334 = vunpack.c.l.b16 %v231
    %v335 = vunpack.c.l.b16 %v232
    %v336 = vunpack.c.l.b16 %v233
    %v337 = vunpack.c.l.b16 %v234
    %v338 = vunpack.c.l.b16 %v235
    %v339 = vunpack.c.l.b16 %v236
    %v340 = vunpack.c.l.b16 %v237
    %v341 = vunpack.c.l.b16 %v238
    %v342 = vunpack.c.l.b16 %v239
    %v343 = vunpack.c.l.b16 %v240
    %v344 = vunpack.c.l.b16 %v241
    %v345 = vunpack.c.l.b16 %v242
    %v346 = vunpack.c.l.b16 %v243
    %v347 = vunpack.c.l.b16 %v244
    %v348 = vunpack.c.l.b16 %v245
    %v349 = vpack.c.b16 %v302, %v301
    %v350 = vpack.c.b16 %v304, %v303
    %v351 = vpack.c.b16 %v306, %v305
    %v352 = vpack.c.b16 %v308, %v307
    %v353 = vpack.c.b16 %v310, %v309
    %v354 = vpack.c.b16 %v312, %v311
    %v355 = vpack.c.b16 %v314, %v313
    %v356 = vpack.c.b16 %v316, %v315
    %v357 = vpack.c.b16 %v318, %v317
    %v358 = vpack.c.b16 %v320, %v319
    %v359 = vpack.c.b16 %v322, %v321
    %v360 = vpack.c.b16 %v324, %v323
    %v361 = vpack.c.b16 %v326, %v325
    %v362 = vpack.c.b16 %v328, %v327
    %v363 = vpack.c.b16 %v330, %v329
    %v364 = vpack.c.b16 %v332, %v331
    %v365 = vpack.c.b16 %v334, %v333
    %v366 = vpack.c.b16 %v336, %v335
    %v367 = vpack.c.b16 %v338, %v337
    %v368 = vpack.c.b16 %v340, %v339
    %v369 = vpack.c.b16 %v342, %v341
    %v370 = vpack.c.b16 %v344, %v343
    %v371 = vpack.c.b16 %v346, %v345
    %v372 = vpack.c.b16 %v348, %v347
    %397 = vmatprep.subr.bf16.mxu0 0
    %398 = vmatpush1.bf16.msra.mxu0 %v356
    %399 = vmatprep.subr.bf16.mxu0 0
    %400 = vmatpush1.bf16.msra.mxu0 %v355
    %401 = vmatprep.subr.bf16.mxu0 0
    %402 = vmatpush1.bf16.msra.mxu0 %v354
    %403 = vmatprep.subr.bf16.mxu0 0
    %404 = vmatpush1.bf16.msra.mxu0 %v353
    %405 = vmatprep.subr.bf16.mxu0 0
    %406 = vmatpush1.bf16.msra.mxu0 %v352
    %407 = vmatprep.subr.bf16.mxu0 0
    %408 = vmatpush1.bf16.msra.mxu0 %v351
    %409 = vmatprep.subr.bf16.mxu0 0
    %410 = vmatpush1.bf16.msra.mxu0 %v350
    %411 = vmatprep.subr.bf16.mxu0 0
    %412 = vmatpush1.bf16.msra.mxu0 %v349
    %413 = vmatprep.subr.bf16.mxu0 0
    %414 = vmatpush2.bf16.msra.mxu0 %v364
    %415 = vmatprep.subr.bf16.mxu0 0
    %416 = vmatpush2.bf16.msra.mxu0 %v363
    %417 = vmatprep.subr.bf16.mxu0 0
    %418 = vmatpush2.bf16.msra.mxu0 %v362
    %419 = vmatprep.subr.bf16.mxu0 0
    %420 = vmatpush2.bf16.msra.mxu0 %v361
    %421 = vmatprep.subr.bf16.mxu0 0
    %422 = vmatpush2.bf16.msra.mxu0 %v360
    %423 = vmatprep.subr.bf16.mxu0 0
    %424 = vmatpush2.bf16.msra.mxu0 %v359
    %425 = vmatprep.subr.bf16.mxu0 0
    %426 = vmatpush2.bf16.msra.mxu0 %v358
    %427 = vmatprep.subr.bf16.mxu0 0
    %428 = vmatpush2.bf16.msra.mxu0 %v357
    %429 = vmatprep.mubr.bf16.mxu0 %v193
    %430 = vmatmul.mubr.bf16.gmra.mxu0 %v192
    %v431 = vpop.f32.mrf.mxu0
    %v432 = vadd.f32 %v251, %v431
    %v433 = vpop.f32.mrf.mxu0
    %v434 = vpop.f32.mrf.mxu0
    %v435 = vadd.f32 %v251, %v434
    %v436 = vpop.f32.mrf.mxu0
    %437 = vmatprep.mubr.bf16.mxu0 %v196
    %438 = vmatmul.mubr.bf16.gmra.mxu0 %v195
    %v439 = vpop.f32.mrf.mxu0
    %v440 = vadd.f32 %v251, %v439
    %v441 = vpop.f32.mrf.mxu0
    %v442 = vpop.f32.mrf.mxu0
    %v443 = vadd.f32 %v251, %v442
    %v444 = vpop.f32.mrf.mxu0
    %445 = vdwg.mxu0
    %446 = vmatprep.subr.bf16.mxu0 0
    %447 = vmatpush1.bf16.msra.mxu0 %v372
    %448 = vmatprep.subr.bf16.mxu0 0
    %449 = vmatpush1.bf16.msra.mxu0 %v371
    %450 = vmatprep.subr.bf16.mxu0 0
    %451 = vmatpush1.bf16.msra.mxu0 %v370
    %452 = vmatprep.subr.bf16.mxu0 0
    %453 = vmatpush1.bf16.msra.mxu0 %v369
    %454 = vmatprep.subr.bf16.mxu0 0
    %455 = vmatpush1.bf16.msra.mxu0 %v368
    %456 = vmatprep.subr.bf16.mxu0 0
    %457 = vmatpush1.bf16.msra.mxu0 %v367
    %458 = vmatprep.subr.bf16.mxu0 0
    %459 = vmatpush1.bf16.msra.mxu0 %v366
    %460 = vmatprep.subr.bf16.mxu0 0
    %461 = vmatpush1.bf16.msra.mxu0 %v365
    %462 = vmatprep.subr.bf16.mxu0 0
    %463 = vmatpush2.bf16.msra.mxu0 0
    %464 = vmatprep.subr.bf16.mxu0 0
    %465 = vmatpush2.bf16.msra.mxu0 0
    %466 = vmatprep.subr.bf16.mxu0 0
    %467 = vmatpush2.bf16.msra.mxu0 0
    %468 = vmatprep.subr.bf16.mxu0 0
    %469 = vmatpush2.bf16.msra.mxu0 0
    %470 = vmatprep.subr.bf16.mxu0 0
    %471 = vmatpush2.bf16.msra.mxu0 0
    %472 = vmatprep.subr.bf16.mxu0 0
    %473 = vmatpush2.bf16.msra.mxu0 0
    %474 = vmatprep.subr.bf16.mxu0 0
    %475 = vmatpush2.bf16.msra.mxu0 0
    %476 = vmatprep.subr.bf16.mxu0 0
    %477 = vmatpush2.bf16.msra.mxu0 0
    %478 = vmatprep.mubr.bf16.mxu0 0
    %479 = vmatmul.mubr.bf16.gmra.mxu0 %v194
    %v480 = vpop.f32.mrf.mxu0
    %v481 = vadd.f32 %v432, %v480
    %v482 = vpop.f32.mrf.mxu0
    %v483 = vpop.f32.mrf.mxu0
    %v484 = vadd.f32 %v435, %v483
    %v485 = vpop.f32.mrf.mxu0
    %486 = vmatprep.mubr.bf16.mxu0 0
    %487 = vmatmul.mubr.bf16.gmra.mxu0 %v197
    %v488 = vpop.f32.mrf.mxu0
    %v489 = vadd.f32 %v440, %v488
    %v490 = vpop.f32.mrf.mxu0
    %v491 = vpop.f32.mrf.mxu0
    %v492 = vadd.f32 %v443, %v491
    %v493 = vpop.f32.mrf.mxu0
    %494 = vdwg.mxu0
    %495 = vst [vmem:[#allocation2] sm:$0xff] %v481
    %496 = vst [vmem:[#allocation2 + $0x8] sm:$0xff] %v484
    %497 = vst [vmem:[#allocation2 + $0x10] sm:$0xff] %v489
    %498 = vst [vmem:[#allocation2 + $0x18] sm:$0xff] %v492
    // Predicated region
    $region22: #{spt_forward.1} parent=1 // pred_check
      _
    $region23: #{spt_forward.1} parent=1 // pred_check_branch
      %500 = sbr.rel (0) target = $region25
    $region24: #{spt_forward.1} parent=1 // pred_region
      %s502 = ssub.s32 512, 512
      %503 = vsyncadd [#allocation3], %s502
      %s504 = sshll.u32 [#allocation2], 4
      %s505 = int_to_ptr.vmem [resolvable:$true] %s504
      %510 = dma.vmem_to_hbm [thread:$0]  %s505, 512, %s5, [#allocation3], 128, 128, 8
    $region25: #{spt_forward.1} parent=1 // pred_fallthru
      _
    // Predicated region
    $region26: #{spt_forward.1} parent=1 // pred_check
      _
    $region27: #{spt_forward.1} parent=1 // pred_check_branch
      %512 = sbr.rel (0) target = $region29
    $region28: #{spt_forward.1} parent=1 // pred_region
      %513 = dma.done [#allocation3], 512
    $region29: #{spt_forward.1} parent=1 // pred_fallthru
      _
    %514 = vsyncpa [#allocation3], 1

</llo_original>
